<compile_context>
chip_gen: v5e
topology: v5e:2x2
jax: 0.10.0
libtpu: 0.0.40
codegen_flags: <defaults>
</compile_context>

<pallas_src>
import jax
import jax.numpy as jnp
from jax.experimental import pallas as pl
from jax.experimental.pallas import tpu as pltpu

INPUT_SIZE = 1
HIDDEN_SIZE = 5
OUTPUT_SIZE = 1

# Batch tile: large enough to amortize the ~0.35 us/step grid overhead, small
# enough that 2 buffers of (TB, 1) lane-padded tiles stay far under v7x's 64 MiB VMEM.
_MAX_TB = 2048


def two_layer_nn_kernel(x_ref, p_ref, o_ref):
    x = x_ref[...]                       # (TB, 1) f32
    p = p_ref[...]                       # (4, HIDDEN_SIZE) packed params
    w1 = p[0:1, :]                       # (1, H)  hidden weights (in=1)
    b1 = p[1:2, :]                       # (1, H)  hidden bias
    w2 = p[2:3, :]                       # (1, H)  output weights (out=1)
    b2 = p[3:4, 0:1]                     # (1, 1)  output bias

    # Layer 1 + ReLU: pure VPU broadcast (no MXU push/pop for a K=1 matmul).
    h = jnp.maximum(x * w1 + b1, 0.0)    # (TB, H)
    # Layer 2: elementwise mul + lane reduction (XLU), again no MXU.
    out = jnp.sum(h * w2, axis=-1, keepdims=True) + b2   # (TB, 1)
    o_ref[...] = out.astype(o_ref.dtype)


def pack_params(hidden_weight, hidden_bias, output_weight, output_bias):
    """Pack PyTorch-layout params into one (4, HIDDEN_SIZE) f32 slab (single DMA).

    hidden_weight: (HIDDEN_SIZE, INPUT_SIZE)   -> row 0 (as (1, H), since INPUT_SIZE == 1)
    hidden_bias:   (HIDDEN_SIZE,)              -> row 1
    output_weight: (OUTPUT_SIZE, HIDDEN_SIZE)  -> row 2
    output_bias:   (OUTPUT_SIZE,)              -> row 3 (broadcast across H lanes)
    """
    w1_row = hidden_weight.reshape(1, HIDDEN_SIZE).astype(jnp.float32)
    b1_row = hidden_bias.reshape(1, HIDDEN_SIZE).astype(jnp.float32)
    w2_row = output_weight.reshape(1, HIDDEN_SIZE).astype(jnp.float32)
    b2_row = jnp.full((1, HIDDEN_SIZE), output_bias.reshape(()), dtype=jnp.float32)
    return jnp.concatenate([w1_row, b1_row, w2_row, b2_row], axis=0)   # (4, H)


def two_layer_nn(x, hidden_weight, hidden_bias, output_weight, output_bias):
    """x: (B, INPUT_SIZE) f32. Returns (B, OUTPUT_SIZE) f32. PyTorch nn.Linear layouts."""
    B = x.shape[0]
    params = pack_params(hidden_weight, hidden_bias, output_weight, output_bias)

    tb = B if B <= _MAX_TB else _MAX_TB
    grid = (pl.cdiv(B, tb),)

    return pl.pallas_call(
        two_layer_nn_kernel,
        out_shape=jax.ShapeDtypeStruct((B, OUTPUT_SIZE), jnp.float32),
        grid=grid,
        in_specs=[
            pl.BlockSpec((tb, INPUT_SIZE), lambda i: (i, 0)),       # x: tiled over batch
            pl.BlockSpec(params.shape, lambda i: (0, 0)),           # params: resident
        ],
        out_specs=pl.BlockSpec((tb, OUTPUT_SIZE), lambda i: (i, 0)),
        compiler_params=pltpu.CompilerParams(
            dimension_semantics=("parallel",),                      # shard batch across TCs (v7x)
        ),
    )(x, params)


if __name__ == "__main__":
    key = jax.random.PRNGKey(0)
    kx, k1, k2, k3, k4 = jax.random.split(key, 5)

    batch = 8
    # PyTorch-layout parameters: hidden.weight (5,1), hidden.bias (5,),
    # output.weight (1,5), output.bias (1,).
    x = jax.random.normal(kx, (batch, INPUT_SIZE), dtype=jnp.float32)
    hidden_weight = jax.random.normal(k1, (HIDDEN_SIZE, INPUT_SIZE), dtype=jnp.float32) * 0.5
    hidden_bias = jax.random.normal(k2, (HIDDEN_SIZE,), dtype=jnp.float32) * 0.1
    output_weight = jax.random.normal(k3, (OUTPUT_SIZE, HIDDEN_SIZE), dtype=jnp.float32) * 0.5
    output_bias = jax.random.normal(k4, (OUTPUT_SIZE,), dtype=jnp.float32) * 0.1

    out = two_layer_nn(x, hidden_weight, hidden_bias, output_weight, output_bias)
    jax.block_until_ready(out)

    # Pure-JAX reference (PyTorch semantics: relu(x @ W1^T + b1) @ W2^T + b2).
    h_ref = jnp.maximum(x @ hidden_weight.T + hidden_bias[None, :], 0.0)
    ref = h_ref @ output_weight.T + output_bias[None, :]

    assert out.shape == (batch, OUTPUT_SIZE)
    assert jnp.allclose(out, ref, atol=1e-5, rtol=1e-5)

    print("KERNEL_OK")
</pallas_src>

<mosaic_0001>
module attributes {stable_mosaic.version = 11 : i64} {
  func.func @two_layer_nn_kernel(%arg0: i32, %arg1: memref<8x1xf32, #tpu.memory_space<vmem>>, %arg2: memref<4x5xf32, #tpu.memory_space<vmem>>, %arg3: memref<8x1xf32, #tpu.memory_space<vmem>>) attributes {dimension_semantics = [#tpu.dimension_semantics<parallel>], iteration_bounds = array<i64: 1>, scalar_prefetch = 0 : i64, scratch_operands = 0 : i64, tpu.core_type = #tpu.core_type<tc>, window_params = [{transform_indices = @transform_0, window_bounds = array<i64: 8, 1>}, {pipeline_mode = #tpu.pipeline_mode<synchronous>, transform_indices = @transform_1, window_bounds = array<i64: 4, 5>}, {transform_indices = @transform_2, window_bounds = array<i64: 8, 1>}]} {
    %c0 = arith.constant 0 : index
    %c0_0 = arith.constant 0 : index
    %0 = vector.load %arg1[%c0, %c0_0] : memref<8x1xf32, #tpu.memory_space<vmem>>, vector<8x1xf32>
    %c0_1 = arith.constant 0 : index
    %c0_2 = arith.constant 0 : index
    %1 = vector.load %arg2[%c0_1, %c0_2] : memref<4x5xf32, #tpu.memory_space<vmem>>, vector<4x5xf32>
    %2 = vector.extract_strided_slice %1 {offsets = [0, 0], sizes = [1, 5], strides = [1, 1]} : vector<4x5xf32> to vector<1x5xf32>
    %3 = vector.extract_strided_slice %1 {offsets = [1, 0], sizes = [1, 5], strides = [1, 1]} : vector<4x5xf32> to vector<1x5xf32>
    %4 = vector.extract_strided_slice %1 {offsets = [2, 0], sizes = [1, 5], strides = [1, 1]} : vector<4x5xf32> to vector<1x5xf32>
    %5 = vector.extract_strided_slice %1 {offsets = [3, 0], sizes = [1, 1], strides = [1, 1]} : vector<4x5xf32> to vector<1x1xf32>
    %6 = vector.broadcast %0 : vector<8x1xf32> to vector<8x5xf32>
    %7 = vector.broadcast %2 : vector<1x5xf32> to vector<8x5xf32>
    %8 = arith.mulf %6, %7 : vector<8x5xf32>
    %9 = vector.broadcast %3 : vector<1x5xf32> to vector<8x5xf32>
    %10 = arith.addf %8, %9 : vector<8x5xf32>
    %cst = arith.constant 0.000000e+00 : f32
    %11 = vector.broadcast %cst : f32 to vector<8x5xf32>
    %12 = arith.maximumf %10, %11 : vector<8x5xf32>
    %13 = vector.broadcast %4 : vector<1x5xf32> to vector<8x5xf32>
    %14 = arith.mulf %12, %13 : vector<8x5xf32>
    %cst_3 = arith.constant dense<0.000000e+00> : vector<8xf32>
    %15 = vector.multi_reduction <add>, %14, %cst_3 [1] : vector<8x5xf32> to vector<8xf32>
    %16 = vector.shape_cast %15 : vector<8xf32> to vector<8x1xf32>
    %17 = vector.broadcast %5 : vector<1x1xf32> to vector<8x1xf32>
    %18 = arith.addf %16, %17 : vector<8x1xf32>
    %c0_4 = arith.constant 0 : index
    %c0_5 = arith.constant 0 : index
    %19 = vector.load %arg3[%c0_4, %c0_5] : memref<8x1xf32, #tpu.memory_space<vmem>>, vector<8x1xf32>
    tpu.vector_store %arg3[%c0_4, %c0_5], %18 {strides = array<i32>} : memref<8x1xf32, #tpu.memory_space<vmem>>, vector<8x1xf32>,
    return
  }
  func.func @transform_0(%arg0: i32) -> (i32, i32) {
    %c0_i32 = arith.constant 0 : i32
    %c0_i32_0 = arith.constant 0 : i32
    return %arg0, %c0_i32 : i32, i32
  }
  func.func @transform_1(%arg0: i32) -> (i32, i32) {
    %c0_i32 = arith.constant 0 : i32
    %c0_i32_0 = arith.constant 0 : i32
    %c0_i32_1 = arith.constant 0 : i32
    return %c0_i32, %c0_i32_0 : i32, i32
  }
  func.func @transform_2(%arg0: i32) -> (i32, i32) {
    %c0_i32 = arith.constant 0 : i32
    %c0_i32_0 = arith.constant 0 : i32
    return %arg0, %c0_i32 : i32, i32
  }
}

</mosaic_0001>

<llo_original>
// kernel: tpu_custom_call.1
$region0: #{tpu_custom_call.1}
  #allocation0 [shape = 'u32[]', space=smem, size = 0x4, offset = 0x4, fixed_abs, tag = 'smem constant byte address 0x4 - core index']
  #allocation1 [shape = 'u32[72,128]{1,0:T(1,128)}', space=vmem, size = 0x9000, scoped, tag = 'internal scratch']
  %s0 = inlined_call_operand.vmem [shape: f32[8,1], index: 0, kind: input, shape index: {}]
  %s1 = inlined_call_operand.vmem [shape: f32[4,5], index: 1, kind: input, shape index: {}]
  %s2 = inlined_call_operand.vmem [shape: f32[8,1], index: 2, kind: output, shape index: {}]
  %s3 = sld [smem:[#allocation0]]
  $region18: #{tpu_custom_call.1} parent=0
    _
  %s5 = ssub.s32 1, %s3
  %s6 = scalar_select 0, %s5, %s3
  // Predicated region
  $region2: #{tpu_custom_call.1} parent=0 // pred_check
    _
  $region3: #{tpu_custom_call.1} parent=0 // pred_check_branch
    %8 = sbr.rel (0) target = $region5
  $region4: #{tpu_custom_call.1} parent=0 // pred_region
    _
  $region5: #{tpu_custom_call.1} parent=0 // pred_fallthru
    _
  // Predicated region
  $region6: #{tpu_custom_call.1} parent=0 // pred_check
    _
  $region7: #{tpu_custom_call.1} parent=0 // pred_check_branch
    %10 = sbr.rel (0) target = $region9
  $region8: #{tpu_custom_call.1} parent=0 // pred_region
    _
  $region9: #{tpu_custom_call.1} parent=0 // pred_fallthru
    _
  %v11 = vld [vmem:[%s0] sm:$0xff]
  %v12 = vld [vmem:[%s1] sm:$0xf]
  %14 = vset.pattern.permute.xlu0 0
  %15 = vperm.xlu0 %14, %v11
  %v16 = vpop.permute.xlu0 %15
  %v18 = vperm.slane %v12, 0
  %v19 = vmul.f32 %v16, %v18
  %v20 = vperm.slane %v12, 1
  %v21 = vadd.f32 %v19, %v20
  %v22 = vmax.f32 %v21, 0.0
  %v23 = vperm.slane %v12, 2
  %v24 = vmul.f32 %v22, %v23
  %vm25 = vcmask 39936
  %v26 = vsel %vm25, %v24, 0.0
  %27 = vadd.xlane.f32.xlu0 %v26
  %v28 = vpop.xlane.xlu0 %27
  %v29 = vperm.slane %v12, 3
  %v30 = vadd.f32 %v28, %v29
  %vm31 = vcmask 7168
  %32 = vst.msk [vmem:[%s2] sm:$0xff] %vm31, %v30
  // Predicated region
  $region10: #{tpu_custom_call.1} parent=0 // pred_check
    _
  $region11: #{tpu_custom_call.1} parent=0 // pred_check_branch
    %34 = sbr.rel (0) target = $region13
  $region12: #{tpu_custom_call.1} parent=0 // pred_region
    _
  $region13: #{tpu_custom_call.1} parent=0 // pred_fallthru
    _
  // Predicated region
  $region14: #{tpu_custom_call.1} parent=0 // pred_check
    _
  $region15: #{tpu_custom_call.1} parent=0 // pred_check_branch
    %36 = sbr.rel (0) target = $region17
  $region16: #{tpu_custom_call.1} parent=0 // pred_region
    _
  $region17: #{tpu_custom_call.1} parent=0 // pred_fallthru
    _

</llo_original>
